<compile_context>
chip_gen: v7x
topology: tpu7x:2x2x1
jax: 0.10.0
libtpu: 0.0.40
codegen_flags: <defaults>
</compile_context>

<pallas_src>
import functools

import jax
import jax.numpy as jnp
from jax.experimental import pallas as pl
from jax.experimental.pallas import tpu as pltpu

HIDDEN = 64
LANES = 128          # every layer block padded to 128 lanes (one vreg / MXU pass)
NUM_LAYERS = 5       # fc1, fc2, output, fused-head-1, fused-head-2 (block-diag)


def _qnet_kernel(x_ref, w_ref, b_ref, out_ref, *, state_size):
    """x_ref: (TB, state_size) f32, w_ref: (640,128) bf16, b_ref: (8,128) f32,
    out_ref: (TB,128) bf16 = [advantages | value | zero-pad]."""
    f32 = jnp.float32
    bf16 = jnp.bfloat16

    def dense(h, layer, relu):
        w = w_ref[layer * LANES:(layer + 1) * LANES, :]           # static slice (128,128)
        y = jnp.dot(h, w, preferred_element_type=f32) + b_ref[layer:layer + 1, :]
        if relu:
            y = jnp.maximum(y, 0.0)
        return y.astype(bf16)

    # Layer 0 (fc1): raw f32 state cast in-kernel; contract only against the
    # first `state_size` rows of the first weight block (static slice), so no
    # zero-padded input slab ever touches HBM.
    x = x_ref[...].astype(bf16)                                   # (TB, S)
    w0 = w_ref[0:state_size, :]                                   # (S, 128)
    h = jnp.dot(x, w0, preferred_element_type=f32) + b_ref[0:1, :]
    h = jnp.maximum(h, 0.0).astype(bf16)

    h = dense(h, 1, True)      # fc2 + relu
    h = dense(h, 2, False)     # output (no relu in the torch module)
    h = dense(h, 3, True)      # fused [fcA1 | fcV1] + relu -> (TB,128) = [a | v]
    # fused block-diagonal [fcA2, fcV2] -> lanes [0:A)=adv, lane A=val, rest 0
    w4 = w_ref[4 * LANES:5 * LANES, :]
    y = jnp.dot(h, w4, preferred_element_type=f32) + b_ref[4:5, :]
    out_ref[...] = y.astype(bf16)                                 # bf16 writeback


def qnetwork_forward(state, w_slab, b_slab, *, action_size, tile_batch=4096):
    """state: (B, state_size) f32. Returns (B, action_size) f32 Q-values."""
    B, state_size = state.shape
    assert state_size <= LANES and action_size + 1 <= LANES

    # ---- batch tiling -------------------------------------------------------
    b8 = ((B + 7) // 8) * 8                      # sublane-align the batch
    n_tiles = max(1, -(-b8 // tile_batch))       # enough tiles to cap tb
    if b8 > 8:
        n_tiles = max(n_tiles, 2)                # >=2 tiles: feed v7x's 2nd TC
    if n_tiles > 1 and n_tiles % 2:
        n_tiles += 1                             # even count balances 2 TCs
    tb = ((-(-b8 // n_tiles) + 7) // 8) * 8      # per-tile rows, multiple of 8
    bp = n_tiles * tb                            # padded batch (waste <~ 8*n_tiles rows)

    # Pad ONLY the batch axis of the raw f32 state (tiny: state_size lanes);
    # lane-padding to 128 and the bf16 cast happen inside the kernel.
    x = jnp.pad(state, ((0, bp - B), (0, 0)))

    slab = pl.pallas_call(
        functools.partial(_qnet_kernel, state_size=state_size),
        out_shape=jax.ShapeDtypeStruct((bp, LANES), jnp.bfloat16),
        grid=(n_tiles,),
        in_specs=[
            pl.BlockSpec((tb, state_size), lambda i: (i, 0)),             # raw state (tiled)
            pl.BlockSpec((NUM_LAYERS * LANES, LANES), lambda i: (0, 0)),  # weights (resident)
            pl.BlockSpec((8, LANES), lambda i: (0, 0)),                   # biases  (resident)
        ],
        out_specs=pl.BlockSpec((tb, LANES), lambda i: (i, 0)),
        compiler_params=pltpu.CompilerParams(dimension_semantics=("parallel",)),
    )(x, w_slab, b_slab)

    # Dueling combine in the wrapper: advantages.mean() in the PyTorch module is
    # a GLOBAL mean over batch AND action dims, which couples batch tiles, so it
    # is computed here (in f32) on the un-padded slice.  Padded rows carry
    # bias-propagated garbage and are dropped by the [:B] slice.
    adv = slab[:B, :action_size].astype(jnp.float32)
    val = slab[:B, action_size:action_size + 1].astype(jnp.float32)
    return val + (adv - jnp.mean(adv))


def init_params(key, state_size, action_size, hidden=HIDDEN):
    """Deterministic synthetic init. Weights stored as (in,out); biases as (1,out)."""
    dims = [
        ("w1", "b1", state_size, hidden),
        ("w2", "b2", hidden, hidden),
        ("w3", "b3", hidden, hidden),
        ("wa1", "ba1", hidden, hidden),
        ("wa2", "ba2", hidden, action_size),
        ("wv1", "bv1", hidden, hidden),
        ("wv2", "bv2", hidden, 1),
    ]
    params = {}
    for wname, bname, fan_in, fan_out in dims:
        key, kw, kb = jax.random.split(key, 3)
        bound = 1.0 / jnp.sqrt(float(fan_in))  # mimic torch.nn.Linear default range
        params[wname] = jax.random.uniform(kw, (fan_in, fan_out), jnp.float32, -bound, bound)
        params[bname] = jax.random.uniform(kb, (1, fan_out), jnp.float32, -bound, bound)
    return params


def pack_params(params, state_size, action_size, hidden=HIDDEN):
    """Pack all layers into one bf16 weight slab (5*(128,128)) + one f32 bias slab (8,128)."""
    A = action_size

    def pad_block(w):  # (in, out) -> (128, 128), zero padded
        blk = jnp.zeros((LANES, LANES), jnp.float32)
        return blk.at[:w.shape[0], :w.shape[1]].set(w)

    # fused head layer 1: [fcA1 | fcV1]  -> (hidden, 2*hidden)
    wh1 = jnp.concatenate([params["wa1"], params["wv1"]], axis=1)
    # fused head layer 2: block-diag([fcA2, fcV2]) -> (2*hidden, A+1)
    wh2 = jnp.zeros((2 * hidden, A + 1), jnp.float32)
    wh2 = wh2.at[:hidden, :A].set(params["wa2"])
    wh2 = wh2.at[hidden:, A:].set(params["wv2"])

    w_slab = jnp.concatenate(
        [pad_block(params["w1"]), pad_block(params["w2"]), pad_block(params["w3"]),
         pad_block(wh1), pad_block(wh2)], axis=0).astype(jnp.bfloat16)  # (640, 128)

    b_slab = jnp.zeros((8, LANES), jnp.float32)
    b_slab = b_slab.at[0, :hidden].set(params["b1"][0])
    b_slab = b_slab.at[1, :hidden].set(params["b2"][0])
    b_slab = b_slab.at[2, :hidden].set(params["b3"][0])
    b_slab = b_slab.at[3, :hidden].set(params["ba1"][0])
    b_slab = b_slab.at[3, hidden:2 * hidden].set(params["bv1"][0])
    b_slab = b_slab.at[4, :A].set(params["ba2"][0])
    b_slab = b_slab.at[4, A:A + 1].set(params["bv2"][0])
    return w_slab, b_slab


def qnetwork_reference(state, params):
    """Plain-JAX (f32) reference of the PyTorch forward (for verification)."""
    h = jnp.maximum(state @ params["w1"] + params["b1"], 0.0)
    h = jnp.maximum(h @ params["w2"] + params["b2"], 0.0)
    h = h @ params["w3"] + params["b3"]
    a = jnp.maximum(h @ params["wa1"] + params["ba1"], 0.0)
    adv = a @ params["wa2"] + params["ba2"]
    v = jnp.maximum(h @ params["wv1"] + params["bv1"], 0.0)
    val = v @ params["wv2"] + params["bv2"]
    return val + (adv - jnp.mean(adv))


# TODO(synk): trainNet (MSELoss + backward) is training-side and not implemented here.

if __name__ == "__main__":
    state_size = 8
    action_size = 4
    batch = 8

    key = jax.random.PRNGKey(0)
    key, kx = jax.random.split(key)
    params = init_params(key, state_size, action_size)
    state = jax.random.normal(kx, (batch, state_size), jnp.float32)

    w_slab, b_slab = pack_params(params, state_size, action_size)

    fwd = jax.jit(functools.partial(qnetwork_forward, action_size=action_size))
    out = jax.block_until_ready(fwd(state, w_slab, b_slab))
    ref = qnetwork_reference(state, params)

    assert out.shape == (batch, action_size), out.shape
    # bf16 weights/activations/output with f32 accumulation -> expected
    # quantization error vs the f32 reference (not kernel error).
    assert jnp.allclose(out, ref, atol=5e-2, rtol=5e-2), (out, ref)
    print("KERNEL_OK")
</pallas_src>

<mosaic_0001>
module attributes {stable_mosaic.version = 11 : i64} {
  func.func @_qnet_kernel(%arg0: i32, %arg1: memref<8x8xf32, #tpu.memory_space<vmem>>, %arg2: memref<640x128xbf16, #tpu.memory_space<vmem>>, %arg3: memref<8x128xf32, #tpu.memory_space<vmem>>, %arg4: memref<8x128xbf16, #tpu.memory_space<vmem>>) attributes {dimension_semantics = [#tpu.dimension_semantics<parallel>], iteration_bounds = array<i64: 1>, scalar_prefetch = 0 : i64, scratch_operands = 0 : i64, tpu.core_type = #tpu.core_type<tc>, window_params = [{transform_indices = @transform_0, window_bounds = array<i64: 8, 8>}, {pipeline_mode = #tpu.pipeline_mode<synchronous>, transform_indices = @transform_1, window_bounds = array<i64: 640, 128>}, {pipeline_mode = #tpu.pipeline_mode<synchronous>, transform_indices = @transform_2, window_bounds = array<i64: 8, 128>}, {transform_indices = @transform_3, window_bounds = array<i64: 8, 128>}]} {
    %c0 = arith.constant 0 : index
    %c0_0 = arith.constant 0 : index
    %0 = vector.load %arg1[%c0, %c0_0] : memref<8x8xf32, #tpu.memory_space<vmem>>, vector<8x8xf32>
    %1 = arith.truncf %0 : vector<8x8xf32> to vector<8x8xbf16>
    %c0_1 = arith.constant 0 : index
    %c0_2 = arith.constant 0 : index
    %2 = vector.load %arg2[%c0_1, %c0_2] : memref<640x128xbf16, #tpu.memory_space<vmem>>, vector<8x128xbf16>
    %cst = arith.constant dense<0.000000e+00> : vector<8x128xf32>
    %3 = tpu.matmul %1, %2, %cst {dimension_numbers = #tpu.dot_dimension_numbers<[1], [0], [0], [1], [0, 0, 1, 1], [], []>} : vector<8x8xbf16>, vector<8x128xbf16>, vector<8x128xf32> -> vector<8x128xf32>
    %c0_3 = arith.constant 0 : index
    %c0_4 = arith.constant 0 : index
    %4 = vector.load %arg3[%c0_3, %c0_4] : memref<8x128xf32, #tpu.memory_space<vmem>>, vector<1x128xf32>
    %5 = vector.broadcast %4 : vector<1x128xf32> to vector<8x128xf32>
    %6 = arith.addf %3, %5 : vector<8x128xf32>
    %cst_5 = arith.constant 0.000000e+00 : f32
    %7 = vector.broadcast %cst_5 : f32 to vector<8x128xf32>
    %8 = arith.maximumf %6, %7 : vector<8x128xf32>
    %9 = arith.truncf %8 : vector<8x128xf32> to vector<8x128xbf16>
    %c128 = arith.constant 128 : index
    %c0_6 = arith.constant 0 : index
    %10 = vector.load %arg2[%c128, %c0_6] : memref<640x128xbf16, #tpu.memory_space<vmem>>, vector<128x128xbf16>
    %cst_7 = arith.constant dense<0.000000e+00> : vector<8x128xf32>
    %11 = tpu.matmul %9, %10, %cst_7 {dimension_numbers = #tpu.dot_dimension_numbers<[1], [0], [0], [1], [0, 0, 1, 1], [], []>} : vector<8x128xbf16>, vector<128x128xbf16>, vector<8x128xf32> -> vector<8x128xf32>
    %c1 = arith.constant 1 : index
    %c0_8 = arith.constant 0 : index
    %12 = vector.load %arg3[%c1, %c0_8] : memref<8x128xf32, #tpu.memory_space<vmem>>, vector<1x128xf32>
    %13 = vector.broadcast %12 : vector<1x128xf32> to vector<8x128xf32>
    %14 = arith.addf %11, %13 : vector<8x128xf32>
    %cst_9 = arith.constant 0.000000e+00 : f32
    %15 = vector.broadcast %cst_9 : f32 to vector<8x128xf32>
    %16 = arith.maximumf %14, %15 : vector<8x128xf32>
    %17 = arith.truncf %16 : vector<8x128xf32> to vector<8x128xbf16>
    %c256 = arith.constant 256 : index
    %c0_10 = arith.constant 0 : index
    %18 = vector.load %arg2[%c256, %c0_10] : memref<640x128xbf16, #tpu.memory_space<vmem>>, vector<128x128xbf16>
    %cst_11 = arith.constant dense<0.000000e+00> : vector<8x128xf32>
    %19 = tpu.matmul %17, %18, %cst_11 {dimension_numbers = #tpu.dot_dimension_numbers<[1], [0], [0], [1], [0, 0, 1, 1], [], []>} : vector<8x128xbf16>, vector<128x128xbf16>, vector<8x128xf32> -> vector<8x128xf32>
    %c2 = arith.constant 2 : index
    %c0_12 = arith.constant 0 : index
    %20 = vector.load %arg3[%c2, %c0_12] : memref<8x128xf32, #tpu.memory_space<vmem>>, vector<1x128xf32>
    %21 = vector.broadcast %20 : vector<1x128xf32> to vector<8x128xf32>
    %22 = arith.addf %19, %21 : vector<8x128xf32>
    %23 = arith.truncf %22 : vector<8x128xf32> to vector<8x128xbf16>
    %c384 = arith.constant 384 : index
    %c0_13 = arith.constant 0 : index
    %24 = vector.load %arg2[%c384, %c0_13] : memref<640x128xbf16, #tpu.memory_space<vmem>>, vector<128x128xbf16>
    %cst_14 = arith.constant dense<0.000000e+00> : vector<8x128xf32>
    %25 = tpu.matmul %23, %24, %cst_14 {dimension_numbers = #tpu.dot_dimension_numbers<[1], [0], [0], [1], [0, 0, 1, 1], [], []>} : vector<8x128xbf16>, vector<128x128xbf16>, vector<8x128xf32> -> vector<8x128xf32>
    %c3 = arith.constant 3 : index
    %c0_15 = arith.constant 0 : index
    %26 = vector.load %arg3[%c3, %c0_15] : memref<8x128xf32, #tpu.memory_space<vmem>>, vector<1x128xf32>
    %27 = vector.broadcast %26 : vector<1x128xf32> to vector<8x128xf32>
    %28 = arith.addf %25, %27 : vector<8x128xf32>
    %cst_16 = arith.constant 0.000000e+00 : f32
    %29 = vector.broadcast %cst_16 : f32 to vector<8x128xf32>
    %30 = arith.maximumf %28, %29 : vector<8x128xf32>
    %31 = arith.truncf %30 : vector<8x128xf32> to vector<8x128xbf16>
    %c512 = arith.constant 512 : index
    %c0_17 = arith.constant 0 : index
    %32 = vector.load %arg2[%c512, %c0_17] : memref<640x128xbf16, #tpu.memory_space<vmem>>, vector<128x128xbf16>
    %cst_18 = arith.constant dense<0.000000e+00> : vector<8x128xf32>
    %33 = tpu.matmul %31, %32, %cst_18 {dimension_numbers = #tpu.dot_dimension_numbers<[1], [0], [0], [1], [0, 0, 1, 1], [], []>} : vector<8x128xbf16>, vector<128x128xbf16>, vector<8x128xf32> -> vector<8x128xf32>
    %c4 = arith.constant 4 : index
    %c0_19 = arith.constant 0 : index
    %34 = vector.load %arg3[%c4, %c0_19] : memref<8x128xf32, #tpu.memory_space<vmem>>, vector<1x128xf32>
    %35 = vector.broadcast %34 : vector<1x128xf32> to vector<8x128xf32>
    %36 = arith.addf %33, %35 : vector<8x128xf32>
    %37 = arith.truncf %36 : vector<8x128xf32> to vector<8x128xbf16>
    %c0_20 = arith.constant 0 : index
    %c0_21 = arith.constant 0 : index
    %38 = vector.load %arg4[%c0_20, %c0_21] : memref<8x128xbf16, #tpu.memory_space<vmem>>, vector<8x128xbf16>
    tpu.vector_store %arg4[%c0_20, %c0_21], %37 {strides = array<i32>} : memref<8x128xbf16, #tpu.memory_space<vmem>>, vector<8x128xbf16>,
    return
  }
  func.func @transform_0(%arg0: i32) -> (i32, i32) {
    %c0_i32 = arith.constant 0 : i32
    %c0_i32_0 = arith.constant 0 : i32
    return %arg0, %c0_i32 : i32, i32
  }
  func.func @transform_1(%arg0: i32) -> (i32, i32) {
    %c0_i32 = arith.constant 0 : i32
    %c0_i32_0 = arith.constant 0 : i32
    %c0_i32_1 = arith.constant 0 : i32
    return %c0_i32, %c0_i32_0 : i32, i32
  }
  func.func @transform_2(%arg0: i32) -> (i32, i32) {
    %c0_i32 = arith.constant 0 : i32
    %c0_i32_0 = arith.constant 0 : i32
    %c0_i32_1 = arith.constant 0 : i32
    return %c0_i32, %c0_i32_0 : i32, i32
  }
  func.func @transform_3(%arg0: i32) -> (i32, i32) {
    %c0_i32 = arith.constant 0 : i32
    %c0_i32_0 = arith.constant 0 : i32
    return %arg0, %c0_i32 : i32, i32
  }
}

</mosaic_0001>

<llo_original>
// kernel: qnetwork_forward.1
$region0: #{qnetwork_forward.1}
  #allocation0 [shape = 'u32[]', space=smem, size = 0x4, offset = 0x4, fixed_abs, tag = 'smem constant byte address 0x4 - core index']
  #allocation1 [shape = 'u32[144,128]{1,0:T(1,128)}', space=vmem, size = 0x12000, scoped, tag = 'internal scratch']
  %s0 = inlined_call_operand.hbm [shape: f32[8,8], index: 0, kind: input, shape index: {}]
  %s1 = inlined_call_operand.hbm [shape: bf16[640,128], index: 1, kind: input, shape index: {}]
  %s2 = inlined_call_operand.hbm [shape: f32[8,128], index: 2, kind: input, shape index: {}]
  %s3 = inlined_call_operand.vmem [shape: bf16[8,128], index: 3, kind: output, shape index: {}]
  %s4 = sld [smem:[#allocation0]]
  $region34: #{qnetwork_forward.1} parent=0
    _
  %s6 = ssub.s32 1, %s4
  %s7 = scalar_select 0, %s6, %s4
  $region1: #{qnetwork_forward.1} parent=0
    #allocation2 [shape = 'u8[4096]{0}', space=vmem, size = 0x1000, scoped, tag = 'input window, operand 0, single buffered']
    #allocation3 [shape = 's32[1]{0}', space=sflag, size = 0x4, scoped, tag = 'scoped memory for qnetwork_forward.1']
    #allocation4 [shape = 'u8[163840]{0}', space=vmem, size = 0x28000, scoped, tag = 'input window, operand 1, single buffered']
    #allocation5 [shape = 's32[1]{0}', space=sflag, size = 0x4, scoped, tag = 'scoped memory for qnetwork_forward.1']
    #allocation6 [shape = 'u8[4096]{0}', space=vmem, size = 0x1000, scoped, tag = 'input window, operand 2, single buffered']
    %8 = vsyncpa [#allocation3], 0
    %9 = vsyncpa [#allocation5], 0
    // Predicated region
    $region2: #{qnetwork_forward.1} parent=1 // pred_check
      _
    $region3: #{qnetwork_forward.1} parent=1 // pred_check_branch
      %11 = sbr.rel (0) target = $region5
    $region4: #{qnetwork_forward.1} parent=1 // pred_region
      %s13 = ssub.s32 128, 128
      %14 = vsyncadd [#allocation3], %s13
      %s16 = sshll.u32 [#allocation2], 4
      %s17 = int_to_ptr.vmem [resolvable:$true] %s16
      %19 = dma.hbm_to_vmem [thread:$0]  %s0, 128, %s17, [#allocation3]
    $region5: #{qnetwork_forward.1} parent=1 // pred_fallthru
      _
    // Predicated region
    $region6: #{qnetwork_forward.1} parent=1 // pred_check
      _
    $region7: #{qnetwork_forward.1} parent=1 // pred_check_branch
      %21 = sbr.rel (0) target = $region9
    $region8: #{qnetwork_forward.1} parent=1 // pred_region
      %s23 = ssub.s32 5120, 5120
      %24 = vsyncadd [#allocation5], %s23
      %s25 = sshll.u32 [#allocation4], 4
      %s26 = int_to_ptr.vmem [resolvable:$true] %s25
      %31 = dma.hbm_to_vmem [thread:$0]  %s1, 5120, %s26, [#allocation5], 64, 64, 4
    $region9: #{qnetwork_forward.1} parent=1 // pred_fallthru
      _
    // Predicated region
    $region10: #{qnetwork_forward.1} parent=1 // pred_check
      _
    $region11: #{qnetwork_forward.1} parent=1 // pred_check_branch
      %33 = sbr.rel (0) target = $region13
    $region12: #{qnetwork_forward.1} parent=1 // pred_region
      %s35 = ssub.s32 128, 128
      %36 = vsyncadd [#allocation5], %s35
      %s38 = sshll.u32 [#allocation6], 4
      %s39 = int_to_ptr.vmem [resolvable:$true] %s38
      %41 = dma.hbm_to_vmem [thread:$0]  %s2, 128, %s39, [#allocation5]
    $region13: #{qnetwork_forward.1} parent=1 // pred_fallthru
      _
    // Predicated region
    $region14: #{qnetwork_forward.1} parent=1 // pred_check
      _
    $region15: #{qnetwork_forward.1} parent=1 // pred_check_branch
      %43 = sbr.rel (0) target = $region17
    $region16: #{qnetwork_forward.1} parent=1 // pred_region
      %44 = dma.done [#allocation3], 128
    $region17: #{qnetwork_forward.1} parent=1 // pred_fallthru
      _
    // Predicated region
    $region18: #{qnetwork_forward.1} parent=1 // pred_check
      _
    $region19: #{qnetwork_forward.1} parent=1 // pred_check_branch
      %46 = sbr.rel (0) target = $region21
    $region20: #{qnetwork_forward.1} parent=1 // pred_region
      %47 = dma.done [#allocation5], 5120
    $region21: #{qnetwork_forward.1} parent=1 // pred_fallthru
      _
    // Predicated region
    $region22: #{qnetwork_forward.1} parent=1 // pred_check
      _
    $region23: #{qnetwork_forward.1} parent=1 // pred_check_branch
      %49 = sbr.rel (0) target = $region25
    $region24: #{qnetwork_forward.1} parent=1 // pred_region
      %50 = dma.done [#allocation5], 128
    $region25: #{qnetwork_forward.1} parent=1 // pred_fallthru
      _
    %v52 = vld [vmem:[#allocation2] sm:$0xff]
    %v53 = vpack.c.bf16 %v52, %v52
    %v54 = vld [vmem:[#allocation4] sm:$0xf]
    %v55 = vld [vmem:[#allocation6] sm:$0x1]
    %v56 = vlaneseq
    %v57 = vshrl.u32 %v56, 7
    %v58 = vsub.s32 0, %v57
    %v59 = vrot.slane %v55, %v58
    %vm60 = vcmask 64512
    %v62 = vsel %vm60, %v53, 0
    %vm64 = vcmask 1043456
    %v66 = vsel %vm64, %v54, 0
    %68 = vmatprep.subr.bf16.mxu0 0
    %69 = vmatpush1.bf16.msra.mxu0 %v66
    %70 = vmatprep.subr.bf16.mxu0 0
    %71 = vmatpush1.bf16.msra.mxu0 0
    %72 = vmatprep.subr.bf16.mxu0 0
    %73 = vmatpush1.bf16.msra.mxu0 0
    %74 = vmatprep.subr.bf16.mxu0 0
    %75 = vmatpush1.bf16.msra.mxu0 0
    %76 = vmatprep.subr.bf16.mxu0 0
    %77 = vmatpush1.bf16.msra.mxu0 0
    %78 = vmatprep.subr.bf16.mxu0 0
    %79 = vmatpush1.bf16.msra.mxu0 0
    %80 = vmatprep.subr.bf16.mxu0 0
    %81 = vmatpush1.bf16.msra.mxu0 0
    %82 = vmatprep.subr.bf16.mxu0 0
    %83 = vmatpush1.bf16.msra.mxu0 0
    %84 = vmatprep.subr.bf16.mxu0 0
    %85 = vmatpush1.bf16.msra.mxu0 0
    %86 = vmatprep.subr.bf16.mxu0 0
    %87 = vmatpush1.bf16.msra.mxu0 0
    %88 = vmatprep.subr.bf16.mxu0 0
    %89 = vmatpush1.bf16.msra.mxu0 0
    %90 = vmatprep.subr.bf16.mxu0 0
    %91 = vmatpush1.bf16.msra.mxu0 0
    %92 = vmatprep.subr.bf16.mxu0 0
    %93 = vmatpush1.bf16.msra.mxu0 0
    %94 = vmatprep.subr.bf16.mxu0 0
    %95 = vmatpush1.bf16.msra.mxu0 0
    %96 = vmatprep.subr.bf16.mxu0 0
    %97 = vmatpush1.bf16.msra.mxu0 0
    %98 = vmatprep.subr.bf16.mxu0 0
    %99 = vmatpush1.bf16.msra.mxu0 0
    %100 = vmatprep.mubr.bf16.mxu0 0
    %101 = vmatmul.mubr.bf16.gmra.mrb[0].mxu0 %v62
    %v102 = vpop.f32.mrb[0].mxu0
    %v103 = vadd.f32 %v59, %v102
    %v104 = vpop.f32.mrb[0].mxu0
    %v105 = vpop.f32.mrb[0].mxu0
    %v106 = vpop.f32.mrb[0].mxu0
    %107 = vdwg.mxu0
    %v108 = vmax.f32 %v103, 0.0
    %v109 = vpack.c.bf16 %v108, %v108
    %v110 = vld [vmem:[#allocation4 + $0x40] sm:$0xf]
    %v111 = vld [vmem:[#allocation4 + $0x44] sm:$0xf]
    %v112 = vld [vmem:[#allocation4 + $0x48] sm:$0xf]
    %v113 = vld [vmem:[#allocation4 + $0x4c] sm:$0xf]
    %v114 = vld [vmem:[#allocation4 + $0x50] sm:$0xf]
    %v115 = vld [vmem:[#allocation4 + $0x54] sm:$0xf]
    %v116 = vld [vmem:[#allocation4 + $0x58] sm:$0xf]
    %v117 = vld [vmem:[#allocation4 + $0x5c] sm:$0xf]
    %v118 = vld [vmem:[#allocation4 + $0x60] sm:$0xf]
    %v119 = vld [vmem:[#allocation4 + $0x64] sm:$0xf]
    %v120 = vld [vmem:[#allocation4 + $0x68] sm:$0xf]
    %v121 = vld [vmem:[#allocation4 + $0x6c] sm:$0xf]
    %v122 = vld [vmem:[#allocation4 + $0x70] sm:$0xf]
    %v123 = vld [vmem:[#allocation4 + $0x74] sm:$0xf]
    %v124 = vld [vmem:[#allocation4 + $0x78] sm:$0xf]
    %v125 = vld [vmem:[#allocation4 + $0x7c] sm:$0xf]
    %v126 = vld [vmem:[#allocation6 + $0x1] sm:$0x1]
    %v127 = vlaneseq
    %v128 = vshrl.u32 %v127, 7
    %v129 = vsub.s32 0, %v128
    %v130 = vrot.slane %v126, %v129
    %v147 = vunpack.c.l.b16 %v110
    %v148 = vunpack.c.l.b16 %v111
    %v149 = vunpack.c.l.b16 %v112
    %v150 = vunpack.c.l.b16 %v113
    %v151 = vunpack.c.l.b16 %v114
    %v152 = vunpack.c.l.b16 %v115
    %v153 = vunpack.c.l.b16 %v116
    %v154 = vunpack.c.l.b16 %v117
    %v155 = vunpack.c.l.b16 %v118
    %v156 = vunpack.c.l.b16 %v119
    %v157 = vunpack.c.l.b16 %v120
    %v158 = vunpack.c.l.b16 %v121
    %v159 = vunpack.c.l.b16 %v122
    %v160 = vunpack.c.l.b16 %v123
    %v161 = vunpack.c.l.b16 %v124
    %v162 = vunpack.c.l.b16 %v125
    %v163 = vpack.c.b16 %v148, %v147
    %v164 = vpack.c.b16 %v150, %v149
    %v165 = vpack.c.b16 %v152, %v151
    %v166 = vpack.c.b16 %v154, %v153
    %v167 = vpack.c.b16 %v156, %v155
    %v168 = vpack.c.b16 %v158, %v157
    %v169 = vpack.c.b16 %v160, %v159
    %v170 = vpack.c.b16 %v162, %v161
    %179 = vmatprep.subr.bf16.mxu0 0
    %180 = vmatpush1.bf16.msra.mxu0 %v163
    %181 = vmatprep.subr.bf16.mxu0 0
    %182 = vmatpush1.bf16.msra.mxu0 %v164
    %183 = vmatprep.subr.bf16.mxu0 0
    %184 = vmatpush1.bf16.msra.mxu0 %v165
    %185 = vmatprep.subr.bf16.mxu0 0
    %186 = vmatpush1.bf16.msra.mxu0 %v166
    %187 = vmatprep.subr.bf16.mxu0 0
    %188 = vmatpush1.bf16.msra.mxu0 %v167
    %189 = vmatprep.subr.bf16.mxu0 0
    %190 = vmatpush1.bf16.msra.mxu0 %v168
    %191 = vmatprep.subr.bf16.mxu0 0
    %192 = vmatpush1.bf16.msra.mxu0 %v169
    %193 = vmatprep.subr.bf16.mxu0 0
    %194 = vmatpush1.bf16.msra.mxu0 %v170
    %195 = vmatprep.subr.bf16.mxu0 0
    %196 = vmatpush1.bf16.msra.mxu0 0
    %197 = vmatprep.subr.bf16.mxu0 0
    %198 = vmatpush1.bf16.msra.mxu0 0
    %199 = vmatprep.subr.bf16.mxu0 0
    %200 = vmatpush1.bf16.msra.mxu0 0
    %201 = vmatprep.subr.bf16.mxu0 0
    %202 = vmatpush1.bf16.msra.mxu0 0
    %203 = vmatprep.subr.bf16.mxu0 0
    %204 = vmatpush1.bf16.msra.mxu0 0
    %205 = vmatprep.subr.bf16.mxu0 0
    %206 = vmatpush1.bf16.msra.mxu0 0
    %207 = vmatprep.subr.bf16.mxu0 0
    %208 = vmatpush1.bf16.msra.mxu0 0
    %209 = vmatprep.subr.bf16.mxu0 0
    %210 = vmatpush1.bf16.msra.mxu0 0
    %211 = vmatprep.mubr.bf16.mxu0 0
    %212 = vmatmul.mubr.bf16.gmra.mrb[0].mxu0 %v109
    %v213 = vpop.f32.mrb[0].mxu0
    %v214 = vadd.f32 %v130, %v213
    %v215 = vpop.f32.mrb[0].mxu0
    %v216 = vpop.f32.mrb[0].mxu0
    %v217 = vpop.f32.mrb[0].mxu0
    %218 = vdwg.mxu0
    %v219 = vmax.f32 %v214, 0.0
    %v220 = vpack.c.bf16 %v219, %v219
    %v221 = vld [vmem:[#allocation4 + $0x80] sm:$0xf]
    %v222 = vld [vmem:[#allocation4 + $0x84] sm:$0xf]
    %v223 = vld [vmem:[#allocation4 + $0x88] sm:$0xf]
    %v224 = vld [vmem:[#allocation4 + $0x8c] sm:$0xf]
    %v225 = vld [vmem:[#allocation4 + $0x90] sm:$0xf]
    %v226 = vld [vmem:[#allocation4 + $0x94] sm:$0xf]
    %v227 = vld [vmem:[#allocation4 + $0x98] sm:$0xf]
    %v228 = vld [vmem:[#allocation4 + $0x9c] sm:$0xf]
    %v229 = vld [vmem:[#allocation4 + $0xa0] sm:$0xf]
    %v230 = vld [vmem:[#allocation4 + $0xa4] sm:$0xf]
    %v231 = vld [vmem:[#allocation4 + $0xa8] sm:$0xf]
    %v232 = vld [vmem:[#allocation4 + $0xac] sm:$0xf]
    %v233 = vld [vmem:[#allocation4 + $0xb0] sm:$0xf]
    %v234 = vld [vmem:[#allocation4 + $0xb4] sm:$0xf]
    %v235 = vld [vmem:[#allocation4 + $0xb8] sm:$0xf]
    %v236 = vld [vmem:[#allocation4 + $0xbc] sm:$0xf]
    %v237 = vld [vmem:[#allocation6 + $0x2] sm:$0x1]
    %v238 = vlaneseq
    %v239 = vshrl.u32 %v238, 7
    %v240 = vsub.s32 0, %v239
    %v241 = vrot.slane %v237, %v240
    %v258 = vunpack.c.l.b16 %v221
    %v259 = vunpack.c.l.b16 %v222
    %v260 = vunpack.c.l.b16 %v223
    %v261 = vunpack.c.l.b16 %v224
    %v262 = vunpack.c.l.b16 %v225
    %v263 = vunpack.c.l.b16 %v226
    %v264 = vunpack.c.l.b16 %v227
    %v265 = vunpack.c.l.b16 %v228
    %v266 = vunpack.c.l.b16 %v229
    %v267 = vunpack.c.l.b16 %v230
    %v268 = vunpack.c.l.b16 %v231
    %v269 = vunpack.c.l.b16 %v232
    %v270 = vunpack.c.l.b16 %v233
    %v271 = vunpack.c.l.b16 %v234
    %v272 = vunpack.c.l.b16 %v235
    %v273 = vunpack.c.l.b16 %v236
    %v274 = vpack.c.b16 %v259, %v258
    %v275 = vpack.c.b16 %v261, %v260
    %v276 = vpack.c.b16 %v263, %v262
    %v277 = vpack.c.b16 %v265, %v264
    %v278 = vpack.c.b16 %v267, %v266
    %v279 = vpack.c.b16 %v269, %v268
    %v280 = vpack.c.b16 %v271, %v270
    %v281 = vpack.c.b16 %v273, %v272
    %290 = vmatprep.subr.bf16.mxu0 0
    %291 = vmatpush1.bf16.msra.mxu0 %v274
    %292 = vmatprep.subr.bf16.mxu0 0
    %293 = vmatpush1.bf16.msra.mxu0 %v275
    %294 = vmatprep.subr.bf16.mxu0 0
    %295 = vmatpush1.bf16.msra.mxu0 %v276
    %296 = vmatprep.subr.bf16.mxu0 0
    %297 = vmatpush1.bf16.msra.mxu0 %v277
    %298 = vmatprep.subr.bf16.mxu0 0
    %299 = vmatpush1.bf16.msra.mxu0 %v278
    %300 = vmatprep.subr.bf16.mxu0 0
    %301 = vmatpush1.bf16.msra.mxu0 %v279
    %302 = vmatprep.subr.bf16.mxu0 0
    %303 = vmatpush1.bf16.msra.mxu0 %v280
    %304 = vmatprep.subr.bf16.mxu0 0
    %305 = vmatpush1.bf16.msra.mxu0 %v281
    %306 = vmatprep.subr.bf16.mxu0 0
    %307 = vmatpush1.bf16.msra.mxu0 0
    %308 = vmatprep.subr.bf16.mxu0 0
    %309 = vmatpush1.bf16.msra.mxu0 0
    %310 = vmatprep.subr.bf16.mxu0 0
    %311 = vmatpush1.bf16.msra.mxu0 0
    %312 = vmatprep.subr.bf16.mxu0 0
    %313 = vmatpush1.bf16.msra.mxu0 0
    %314 = vmatprep.subr.bf16.mxu0 0
    %315 = vmatpush1.bf16.msra.mxu0 0
    %316 = vmatprep.subr.bf16.mxu0 0
    %317 = vmatpush1.bf16.msra.mxu0 0
    %318 = vmatprep.subr.bf16.mxu0 0
    %319 = vmatpush1.bf16.msra.mxu0 0
    %320 = vmatprep.subr.bf16.mxu0 0
    %321 = vmatpush1.bf16.msra.mxu0 0
    %322 = vmatprep.mubr.bf16.mxu0 0
    %323 = vmatmul.mubr.bf16.gmra.mrb[0].mxu0 %v220
    %v324 = vpop.f32.mrb[0].mxu0
    %v325 = vadd.f32 %v241, %v324
    %v326 = vpop.f32.mrb[0].mxu0
    %v327 = vpop.f32.mrb[0].mxu0
    %v328 = vpop.f32.mrb[0].mxu0
    %329 = vdwg.mxu0
    %v330 = vpack.c.bf16 %v325, %v325
    %v331 = vld [vmem:[#allocation4 + $0xc0] sm:$0xf]
    %v332 = vld [vmem:[#allocation4 + $0xc4] sm:$0xf]
    %v333 = vld [vmem:[#allocation4 + $0xc8] sm:$0xf]
    %v334 = vld [vmem:[#allocation4 + $0xcc] sm:$0xf]
    %v335 = vld [vmem:[#allocation4 + $0xd0] sm:$0xf]
    %v336 = vld [vmem:[#allocation4 + $0xd4] sm:$0xf]
    %v337 = vld [vmem:[#allocation4 + $0xd8] sm:$0xf]
    %v338 = vld [vmem:[#allocation4 + $0xdc] sm:$0xf]
    %v339 = vld [vmem:[#allocation4 + $0xe0] sm:$0xf]
    %v340 = vld [vmem:[#allocation4 + $0xe4] sm:$0xf]
    %v341 = vld [vmem:[#allocation4 + $0xe8] sm:$0xf]
    %v342 = vld [vmem:[#allocation4 + $0xec] sm:$0xf]
    %v343 = vld [vmem:[#allocation4 + $0xf0] sm:$0xf]
    %v344 = vld [vmem:[#allocation4 + $0xf4] sm:$0xf]
    %v345 = vld [vmem:[#allocation4 + $0xf8] sm:$0xf]
    %v346 = vld [vmem:[#allocation4 + $0xfc] sm:$0xf]
    %v347 = vld [vmem:[#allocation6 + $0x3] sm:$0x1]
    %v348 = vlaneseq
    %v349 = vshrl.u32 %v348, 7
    %v350 = vsub.s32 0, %v349
    %v351 = vrot.slane %v347, %v350
    %v368 = vunpack.c.l.b16 %v331
    %v369 = vunpack.c.l.b16 %v332
    %v370 = vunpack.c.l.b16 %v333
    %v371 = vunpack.c.l.b16 %v334
    %v372 = vunpack.c.l.b16 %v335
    %v373 = vunpack.c.l.b16 %v336
    %v374 = vunpack.c.l.b16 %v337
    %v375 = vunpack.c.l.b16 %v338
    %v376 = vunpack.c.l.b16 %v339
    %v377 = vunpack.c.l.b16 %v340
    %v378 = vunpack.c.l.b16 %v341
    %v379 = vunpack.c.l.b16 %v342
    %v380 = vunpack.c.l.b16 %v343
    %v381 = vunpack.c.l.b16 %v344
    %v382 = vunpack.c.l.b16 %v345
    %v383 = vunpack.c.l.b16 %v346
    %v384 = vpack.c.b16 %v369, %v368
    %v385 = vpack.c.b16 %v371, %v370
    %v386 = vpack.c.b16 %v373, %v372
    %v387 = vpack.c.b16 %v375, %v374
    %v388 = vpack.c.b16 %v377, %v376
    %v389 = vpack.c.b16 %v379, %v378
    %v390 = vpack.c.b16 %v381, %v380
    %v391 = vpack.c.b16 %v383, %v382
    %400 = vmatprep.subr.bf16.mxu0 0
    %401 = vmatpush1.bf16.msra.mxu0 %v384
    %402 = vmatprep.subr.bf16.mxu0 0
    %403 = vmatpush1.bf16.msra.mxu0 %v385
    %404 = vmatprep.subr.bf16.mxu0 0
    %405 = vmatpush1.bf16.msra.mxu0 %v386
    %406 = vmatprep.subr.bf16.mxu0 0
    %407 = vmatpush1.bf16.msra.mxu0 %v387
    %408 = vmatprep.subr.bf16.mxu0 0
    %409 = vmatpush1.bf16.msra.mxu0 %v388
    %410 = vmatprep.subr.bf16.mxu0 0
    %411 = vmatpush1.bf16.msra.mxu0 %v389
    %412 = vmatprep.subr.bf16.mxu0 0
    %413 = vmatpush1.bf16.msra.mxu0 %v390
    %414 = vmatprep.subr.bf16.mxu0 0
    %415 = vmatpush1.bf16.msra.mxu0 %v391
    %416 = vmatprep.subr.bf16.mxu0 0
    %417 = vmatpush1.bf16.msra.mxu0 0
    %418 = vmatprep.subr.bf16.mxu0 0
    %419 = vmatpush1.bf16.msra.mxu0 0
    %420 = vmatprep.subr.bf16.mxu0 0
    %421 = vmatpush1.bf16.msra.mxu0 0
    %422 = vmatprep.subr.bf16.mxu0 0
    %423 = vmatpush1.bf16.msra.mxu0 0
    %424 = vmatprep.subr.bf16.mxu0 0
    %425 = vmatpush1.bf16.msra.mxu0 0
    %426 = vmatprep.subr.bf16.mxu0 0
    %427 = vmatpush1.bf16.msra.mxu0 0
    %428 = vmatprep.subr.bf16.mxu0 0
    %429 = vmatpush1.bf16.msra.mxu0 0
    %430 = vmatprep.subr.bf16.mxu0 0
    %431 = vmatpush1.bf16.msra.mxu0 0
    %432 = vmatprep.mubr.bf16.mxu0 0
    %433 = vmatmul.mubr.bf16.gmra.mrb[0].mxu0 %v330
    %v434 = vpop.f32.mrb[0].mxu0
    %v435 = vadd.f32 %v351, %v434
    %v436 = vpop.f32.mrb[0].mxu0
    %v437 = vpop.f32.mrb[0].mxu0
    %v438 = vpop.f32.mrb[0].mxu0
    %439 = vdwg.mxu0
    %v440 = vmax.f32 %v435, 0.0
    %v441 = vpack.c.bf16 %v440, %v440
    %v442 = vld [vmem:[#allocation4 + $0x100] sm:$0xf]
    %v443 = vld [vmem:[#allocation4 + $0x104] sm:$0xf]
    %v444 = vld [vmem:[#allocation4 + $0x108] sm:$0xf]
    %v445 = vld [vmem:[#allocation4 + $0x10c] sm:$0xf]
    %v446 = vld [vmem:[#allocation4 + $0x110] sm:$0xf]
    %v447 = vld [vmem:[#allocation4 + $0x114] sm:$0xf]
    %v448 = vld [vmem:[#allocation4 + $0x118] sm:$0xf]
    %v449 = vld [vmem:[#allocation4 + $0x11c] sm:$0xf]
    %v450 = vld [vmem:[#allocation4 + $0x120] sm:$0xf]
    %v451 = vld [vmem:[#allocation4 + $0x124] sm:$0xf]
    %v452 = vld [vmem:[#allocation4 + $0x128] sm:$0xf]
    %v453 = vld [vmem:[#allocation4 + $0x12c] sm:$0xf]
    %v454 = vld [vmem:[#allocation4 + $0x130] sm:$0xf]
    %v455 = vld [vmem:[#allocation4 + $0x134] sm:$0xf]
    %v456 = vld [vmem:[#allocation4 + $0x138] sm:$0xf]
    %v457 = vld [vmem:[#allocation4 + $0x13c] sm:$0xf]
    %v458 = vld [vmem:[#allocation6 + $0x4] sm:$0x1]
    %v459 = vlaneseq
    %v460 = vshrl.u32 %v459, 7
    %v461 = vsub.s32 0, %v460
    %v462 = vrot.slane %v458, %v461
    %v479 = vunpack.c.l.b16 %v442
    %v480 = vunpack.c.l.b16 %v443
    %v481 = vunpack.c.l.b16 %v444
    %v482 = vunpack.c.l.b16 %v445
    %v483 = vunpack.c.l.b16 %v446
    %v484 = vunpack.c.l.b16 %v447
    %v485 = vunpack.c.l.b16 %v448
    %v486 = vunpack.c.l.b16 %v449
    %v487 = vunpack.c.l.b16 %v450
    %v488 = vunpack.c.l.b16 %v451
    %v489 = vunpack.c.l.b16 %v452
    %v490 = vunpack.c.l.b16 %v453
    %v491 = vunpack.c.l.b16 %v454
    %v492 = vunpack.c.l.b16 %v455
    %v493 = vunpack.c.l.b16 %v456
    %v494 = vunpack.c.l.b16 %v457
    %v495 = vpack.c.b16 %v480, %v479
    %v496 = vpack.c.b16 %v482, %v481
    %v497 = vpack.c.b16 %v484, %v483
    %v498 = vpack.c.b16 %v486, %v485
    %v499 = vpack.c.b16 %v488, %v487
    %v500 = vpack.c.b16 %v490, %v489
    %v501 = vpack.c.b16 %v492, %v491
    %v502 = vpack.c.b16 %v494, %v493
    %511 = vmatprep.subr.bf16.mxu0 0
    %512 = vmatpush1.bf16.msra.mxu0 %v495
    %513 = vmatprep.subr.bf16.mxu0 0
    %514 = vmatpush1.bf16.msra.mxu0 %v496
    %515 = vmatprep.subr.bf16.mxu0 0
    %516 = vmatpush1.bf16.msra.mxu0 %v497
    %517 = vmatprep.subr.bf16.mxu0 0
    %518 = vmatpush1.bf16.msra.mxu0 %v498
    %519 = vmatprep.subr.bf16.mxu0 0
    %520 = vmatpush1.bf16.msra.mxu0 %v499
    %521 = vmatprep.subr.bf16.mxu0 0
    %522 = vmatpush1.bf16.msra.mxu0 %v500
    %523 = vmatprep.subr.bf16.mxu0 0
    %524 = vmatpush1.bf16.msra.mxu0 %v501
    %525 = vmatprep.subr.bf16.mxu0 0
    %526 = vmatpush1.bf16.msra.mxu0 %v502
    %527 = vmatprep.subr.bf16.mxu0 0
    %528 = vmatpush1.bf16.msra.mxu0 0
    %529 = vmatprep.subr.bf16.mxu0 0
    %530 = vmatpush1.bf16.msra.mxu0 0
    %531 = vmatprep.subr.bf16.mxu0 0
    %532 = vmatpush1.bf16.msra.mxu0 0
    %533 = vmatprep.subr.bf16.mxu0 0
    %534 = vmatpush1.bf16.msra.mxu0 0
    %535 = vmatprep.subr.bf16.mxu0 0
    %536 = vmatpush1.bf16.msra.mxu0 0
    %537 = vmatprep.subr.bf16.mxu0 0
    %538 = vmatpush1.bf16.msra.mxu0 0
    %539 = vmatprep.subr.bf16.mxu0 0
    %540 = vmatpush1.bf16.msra.mxu0 0
    %541 = vmatprep.subr.bf16.mxu0 0
    %542 = vmatpush1.bf16.msra.mxu0 0
    %543 = vmatprep.mubr.bf16.mxu0 0
    %544 = vmatmul.mubr.bf16.gmra.mrb[0].mxu0 %v441
    %v545 = vpop.f32.mrb[0].mxu0
    %v546 = vadd.f32 %v462, %v545
    %v547 = vpop.f32.mrb[0].mxu0
    %v548 = vpop.f32.mrb[0].mxu0
    %v549 = vpop.f32.mrb[0].mxu0
    %550 = vdwg.mxu0
    %v551 = vpack.c.bf16 %v546, %v546
    %552 = vst [vmem:[%s3] sm:$0xf] %v551
    // Predicated region
    $region26: #{qnetwork_forward.1} parent=1 // pred_check
      _
    $region27: #{qnetwork_forward.1} parent=1 // pred_check_branch
      %554 = sbr.rel (0) target = $region29
    $region28: #{qnetwork_forward.1} parent=1 // pred_region
      _
    $region29: #{qnetwork_forward.1} parent=1 // pred_fallthru
      _
    // Predicated region
    $region30: #{qnetwork_forward.1} parent=1 // pred_check
      _
    $region31: #{qnetwork_forward.1} parent=1 // pred_check_branch
      %556 = sbr.rel (0) target = $region33
    $region32: #{qnetwork_forward.1} parent=1 // pred_region
      _
    $region33: #{qnetwork_forward.1} parent=1 // pred_fallthru
      _
    %557 = vsyncpa [#allocation3], 1
    %558 = vsyncpa [#allocation5], 1

</llo_original>
